<compile_context>
chip_gen: v6e
topology: v6e:2x2x1
jax: 0.10.0
libtpu: 0.0.40
codegen_flags: <defaults>
</compile_context>

<pallas_src>
import math

import jax
import jax.numpy as jnp
from jax.experimental import pallas as pl
from jax.experimental.pallas import tpu as pltpu

_INV_SQRT2 = 1.0 / math.sqrt(2.0)


def _ffn_kernel(x_ref, w1_ref, b1_ref, w2_ref, b2_ref, o_ref, acc_ref, h_ref):
    # Grid = (token tiles, hidden tiles). j tiles the hidden dim: it is the N dim of the
    # first matmul and the contraction dim of the second, so the second matmul accumulates
    # into acc_ref across j and the output is written only on the last j step.
    j = pl.program_id(1)

    @pl.when(j == 0)
    def _init():
        acc_ref[...] = jnp.zeros_like(acc_ref)

    # Linear 1 (this hidden slice), f32 accumulation, then exact (erf) GELU in f32.
    h = jnp.dot(x_ref[...], w1_ref[...], preferred_element_type=jnp.float32)
    h = h + b1_ref[...].astype(jnp.float32)
    h = 0.5 * h * (1.0 + jax.lax.erf(h * _INV_SQRT2))
    h_ref[...] = h.astype(h_ref.dtype)          # explicit VMEM scratch for the intermediate

    # Linear 2 partial product over this hidden slice, accumulated in f32.
    acc_ref[...] += jnp.dot(h_ref[...], w2_ref[...], preferred_element_type=jnp.float32)

    @pl.when(j == pl.num_programs(1) - 1)
    def _finalize():
        o_ref[...] = (acc_ref[...] + b2_ref[...].astype(jnp.float32)).astype(o_ref.dtype)


def _pick_hidden_tile(hidden, dim, w_itemsize, budget_bytes):
    """Largest hidden tile (full hidden, or a 128-multiple dividing it) whose W1-column +
    W2-row blocks fit `budget_bytes` (resident tiles are single-buffered)."""
    candidates = [hidden] + [t for t in (4096, 2048, 1024, 512, 256, 128) if t < hidden]
    for th in candidates:
        if hidden % th:
            continue
        nbuf = 1 if th == hidden else 2
        if nbuf * 2 * dim * th * w_itemsize <= budget_bytes:
            return th
    return 128


def feed_forward(x, w1, b1, w2, b2, *, tm=256, th=None):
    """x: (batch, seq, dim); w1: (dim, hidden); b1: (hidden,); w2: (hidden, dim); b2: (dim,)."""
    batch, seq, dim = x.shape
    hidden = w1.shape[1]
    M = batch * seq

    # Token tile: multiple of the sublane packing (8 rows for f32, 16 for bf16), never
    # bigger than the (rounded-up) token count. Pad M up to a multiple of tm.
    sub = 8 if jnp.dtype(x.dtype).itemsize == 4 else 16
    tm = max(sub, min(tm, pl.cdiv(M, sub) * sub))
    M_pad = pl.cdiv(M, tm) * tm

    w_itemsize = jnp.dtype(w1.dtype).itemsize
    x_itemsize = jnp.dtype(x.dtype).itemsize
    if th is None:
        th = _pick_hidden_tile(hidden, dim, w_itemsize, budget_bytes=40 * 1024 * 1024)
    resident = th == hidden          # weights fully resident -> single-buffer them
    nh = hidden // th

    x2 = x.reshape(M, dim)
    if M_pad != M:
        x2 = jnp.pad(x2, ((0, M_pad - M), (0, 0)))
    b1_2d = b1.reshape(1, hidden)
    b2_2d = b2.reshape(1, dim)

    # Explicit VMEM budget: weight tiles (+double buffer if hidden-tiled), x/out double
    # buffers, the f32 accumulator and the (tm, th) GELU intermediate, + 50% headroom.
    w_vmem = (1 if resident else 2) * (2 * dim * th + th + dim) * w_itemsize
    io_vmem = 2 * 2 * tm * dim * x_itemsize
    scratch_vmem = tm * dim * 4 + tm * th * w_itemsize
    vmem_limit = int(1.5 * (w_vmem + io_vmem + scratch_vmem)) + (4 << 20)
    vmem_limit = min(max(vmem_limit, 32 << 20), 64 << 20)   # stays legal on v7x (64 MiB VMEM)

    cost = pl.CostEstimate(
        flops=4 * M_pad * dim * hidden,                       # two (M, dim, hidden) matmuls
        transcendentals=M_pad * hidden,                       # erf in GELU
        bytes_accessed=(x2.size + M_pad * dim) * x_itemsize
        + (w1.size + w2.size + b1.size + b2.size) * w_itemsize,
    )

    def _build(single_buffer_weights):
        def _spec(shape, index_map, is_resident_operand):
            if single_buffer_weights and is_resident_operand:
                # Constant index_map -> one VMEM buffer is enough; don't double-buffer.
                return pl.BlockSpec(shape, index_map, pipeline_mode=pl.Buffered(1))
            return pl.BlockSpec(shape, index_map)

        return pl.pallas_call(
            _ffn_kernel,
            out_shape=jax.ShapeDtypeStruct((M_pad, dim), x.dtype),
            grid_spec=pltpu.PrefetchScalarGridSpec(
                num_scalar_prefetch=0,
                grid=(M_pad // tm, nh),
                in_specs=[
                    pl.BlockSpec((tm, dim), lambda i, j: (i, 0)),        # x tile
                    _spec((dim, th), lambda i, j: (0, j), resident),     # W1 column block
                    _spec((1, th), lambda i, j: (0, j), resident),       # b1 slice
                    _spec((th, dim), lambda i, j: (j, 0), resident),     # W2 row block
                    _spec((1, dim), lambda i, j: (0, 0), True),          # b2 (always constant)
                ],
                out_specs=pl.BlockSpec((tm, dim), lambda i, j: (i, 0)),
                scratch_shapes=[
                    pltpu.VMEM((tm, dim), jnp.float32),   # f32 accumulator for Linear 2
                    pltpu.VMEM((tm, th), w2.dtype),       # GELU intermediate
                ],
            ),
            compiler_params=pltpu.CompilerParams(
                dimension_semantics=("parallel", "arbitrary"),
                vmem_limit_bytes=vmem_limit,
            ),
            cost_estimate=cost,
        )

    try:
        out = _build(single_buffer_weights=True)(x2, w1, b1_2d, w2, b2_2d)
    except Exception:
        # Graceful degradation if this JAX build does not accept pipeline_mode/Buffered(1)
        # on BlockSpec: fall back to default double-buffering (correctness unchanged).
        out = _build(single_buffer_weights=False)(x2, w1, b1_2d, w2, b2_2d)

    return out[:M].reshape(batch, seq, dim)


def _reference(x, w1, b1, w2, b2):
    h = x @ w1 + b1
    h = jax.nn.gelu(h, approximate=False)
    return h @ w2 + b2


if __name__ == "__main__":
    batch, seq, dim, hidden = 2, 8, 32, 64

    key = jax.random.PRNGKey(0)
    kx, kw1, kb1, kw2, kb2 = jax.random.split(key, 5)

    x = jax.random.normal(kx, (batch, seq, dim), dtype=jnp.float32)

    # Deterministic init mimicking nn.Linear's uniform(-1/sqrt(fan_in), 1/sqrt(fan_in)).
    lim1 = 1.0 / math.sqrt(dim)
    w1 = jax.random.uniform(kw1, (dim, hidden), jnp.float32, -lim1, lim1)
    b1 = jax.random.uniform(kb1, (hidden,), jnp.float32, -lim1, lim1)
    lim2 = 1.0 / math.sqrt(hidden)
    w2 = jax.random.uniform(kw2, (hidden, dim), jnp.float32, -lim2, lim2)
    b2 = jax.random.uniform(kb2, (dim,), jnp.float32, -lim2, lim2)

    # 1) f32 path, strict check against the pure-JAX reference.
    y = jax.block_until_ready(feed_forward(x, w1, b1, w2, b2))
    y_ref = _reference(x, w1, b1, w2, b2)
    assert y.shape == (batch, seq, dim)
    assert jnp.allclose(y, y_ref, atol=1e-5, rtol=1e-5)

    # 2) bf16 weights/activations (half the HBM traffic & weight residency), f32 accumulation.
    y_bf16 = jax.block_until_ready(
        feed_forward(x.astype(jnp.bfloat16),
                     w1.astype(jnp.bfloat16), b1,
                     w2.astype(jnp.bfloat16), b2))
    assert y_bf16.dtype == jnp.bfloat16
    assert jnp.allclose(y_bf16.astype(jnp.float32), y_ref, atol=1e-1, rtol=5e-2)

    # 3) token count not divisible by the tile -> padding path.
    x_odd = x[:, :7, :]
    y_odd = jax.block_until_ready(feed_forward(x_odd, w1, b1, w2, b2))
    assert jnp.allclose(y_odd, _reference(x_odd, w1, b1, w2, b2), atol=1e-5, rtol=1e-5)

    print("KERNEL_OK")
</pallas_src>

<mosaic_0001>
module attributes {stable_mosaic.version = 11 : i64} {
  func.func @_ffn_kernel(%arg0: i32, %arg1: i32, %arg2: memref<16x32xf32, #tpu.memory_space<vmem>>, %arg3: memref<32x64xf32, #tpu.memory_space<vmem>>, %arg4: memref<1x64xf32, #tpu.memory_space<vmem>>, %arg5: memref<64x32xf32, #tpu.memory_space<vmem>>, %arg6: memref<1x32xf32, #tpu.memory_space<vmem>>, %arg7: memref<16x32xf32, #tpu.memory_space<vmem>>, %arg8: memref<16x32xf32, #tpu.memory_space<vmem>>, %arg9: memref<16x64xf32, #tpu.memory_space<vmem>>) attributes {dimension_semantics = [#tpu.dimension_semantics<parallel>, #tpu.dimension_semantics<arbitrary>], iteration_bounds = array<i64: 1, 1>, scalar_prefetch = 0 : i64, scratch_operands = 2 : i64, tpu.core_type = #tpu.core_type<tc>, window_params = [{transform_indices = @transform_0, window_bounds = array<i64: 16, 32>}, {pipeline_mode = #tpu.pipeline_mode<synchronous>, transform_indices = @transform_1, window_bounds = array<i64: 32, 64>}, {pipeline_mode = #tpu.pipeline_mode<synchronous>, transform_indices = @transform_2, window_bounds = array<i64: 1, 64>}, {pipeline_mode = #tpu.pipeline_mode<synchronous>, transform_indices = @transform_3, window_bounds = array<i64: 64, 32>}, {pipeline_mode = #tpu.pipeline_mode<synchronous>, transform_indices = @transform_4, window_bounds = array<i64: 1, 32>}, {transform_indices = @transform_5, window_bounds = array<i64: 16, 32>}]} {
    %c0_i32 = arith.constant 0 : i32
    %0 = arith.cmpi eq, %arg1, %c0_i32 : i32
    %1 = arith.extui %0 : i1 to i32
    %c0_i32_0 = arith.constant 0 : i32
    %2 = arith.cmpi ne, %1, %c0_i32_0 : i32
    scf.if %2 {
      %cst_22 = arith.constant 0.000000e+00 : f32
      %27 = vector.broadcast %cst_22 : f32 to vector<16x32xf32>
      %c0_23 = arith.constant 0 : index
      %c0_24 = arith.constant 0 : index
      %28 = vector.load %arg8[%c0_23, %c0_24] : memref<16x32xf32, #tpu.memory_space<vmem>>, vector<16x32xf32>
      tpu.vector_store %arg8[%c0_23, %c0_24], %27 {strides = array<i32>} : memref<16x32xf32, #tpu.memory_space<vmem>>, vector<16x32xf32>,
    } else {
    }
    %c0 = arith.constant 0 : index
    %c0_1 = arith.constant 0 : index
    %3 = vector.load %arg2[%c0, %c0_1] : memref<16x32xf32, #tpu.memory_space<vmem>>, vector<16x32xf32>
    %c0_2 = arith.constant 0 : index
    %c0_3 = arith.constant 0 : index
    %4 = vector.load %arg3[%c0_2, %c0_3] : memref<32x64xf32, #tpu.memory_space<vmem>>, vector<32x64xf32>
    %cst = arith.constant dense<0.000000e+00> : vector<16x64xf32>
    %5 = tpu.matmul %3, %4, %cst {dimension_numbers = #tpu.dot_dimension_numbers<[1], [0], [0], [1], [0, 0, 1, 1], [], []>} : vector<16x32xf32>, vector<32x64xf32>, vector<16x64xf32> -> vector<16x64xf32>
    %c0_4 = arith.constant 0 : index
    %c0_5 = arith.constant 0 : index
    %6 = vector.load %arg4[%c0_4, %c0_5] : memref<1x64xf32, #tpu.memory_space<vmem>>, vector<1x64xf32>
    %7 = vector.broadcast %6 : vector<1x64xf32> to vector<16x64xf32>
    %8 = arith.addf %5, %7 : vector<16x64xf32>
    %cst_6 = arith.constant 5.000000e-01 : f32
    %9 = vector.broadcast %cst_6 : f32 to vector<16x64xf32>
    %10 = arith.mulf %9, %8 : vector<16x64xf32>
    %cst_7 = arith.constant 0.707106769 : f32
    %11 = vector.broadcast %cst_7 : f32 to vector<16x64xf32>
    %12 = arith.mulf %8, %11 : vector<16x64xf32>
    %13 = math.erf %12 : vector<16x64xf32>
    %cst_8 = arith.constant 1.000000e+00 : f32
    %14 = vector.broadcast %cst_8 : f32 to vector<16x64xf32>
    %15 = arith.addf %14, %13 : vector<16x64xf32>
    %16 = arith.mulf %10, %15 : vector<16x64xf32>
    %c0_9 = arith.constant 0 : index
    %c0_10 = arith.constant 0 : index
    %17 = vector.load %arg9[%c0_9, %c0_10] : memref<16x64xf32, #tpu.memory_space<vmem>>, vector<16x64xf32>
    tpu.vector_store %arg9[%c0_9, %c0_10], %16 {strides = array<i32>} : memref<16x64xf32, #tpu.memory_space<vmem>>, vector<16x64xf32>,
    %c0_11 = arith.constant 0 : index
    %c0_12 = arith.constant 0 : index
    %18 = vector.load %arg8[%c0_11, %c0_12] : memref<16x32xf32, #tpu.memory_space<vmem>>, vector<16x32xf32>
    %c0_13 = arith.constant 0 : index
    %c0_14 = arith.constant 0 : index
    %19 = vector.load %arg9[%c0_13, %c0_14] : memref<16x64xf32, #tpu.memory_space<vmem>>, vector<16x64xf32>
    %c0_15 = arith.constant 0 : index
    %c0_16 = arith.constant 0 : index
    %20 = vector.load %arg5[%c0_15, %c0_16] : memref<64x32xf32, #tpu.memory_space<vmem>>, vector<64x32xf32>
    %cst_17 = arith.constant dense<0.000000e+00> : vector<16x32xf32>
    %21 = tpu.matmul %19, %20, %cst_17 {dimension_numbers = #tpu.dot_dimension_numbers<[1], [0], [0], [1], [0, 0, 1, 1], [], []>} : vector<16x64xf32>, vector<64x32xf32>, vector<16x32xf32> -> vector<16x32xf32>
    %22 = arith.addf %18, %21 : vector<16x32xf32>
    %c0_18 = arith.constant 0 : index
    %c0_19 = arith.constant 0 : index
    %23 = vector.load %arg8[%c0_18, %c0_19] : memref<16x32xf32, #tpu.memory_space<vmem>>, vector<16x32xf32>
    tpu.vector_store %arg8[%c0_18, %c0_19], %22 {strides = array<i32>} : memref<16x32xf32, #tpu.memory_space<vmem>>, vector<16x32xf32>,
    %c0_i32_20 = arith.constant 0 : i32
    %24 = arith.cmpi eq, %arg1, %c0_i32_20 : i32
    %25 = arith.extui %24 : i1 to i32
    %c0_i32_21 = arith.constant 0 : i32
    %26 = arith.cmpi ne, %25, %c0_i32_21 : i32
    scf.if %26 {
      %c0_22 = arith.constant 0 : index
      %c0_23 = arith.constant 0 : index
      %27 = vector.load %arg8[%c0_22, %c0_23] : memref<16x32xf32, #tpu.memory_space<vmem>>, vector<16x32xf32>
      %c0_24 = arith.constant 0 : index
      %c0_25 = arith.constant 0 : index
      %28 = vector.load %arg6[%c0_24, %c0_25] : memref<1x32xf32, #tpu.memory_space<vmem>>, vector<1x32xf32>
      %29 = vector.broadcast %28 : vector<1x32xf32> to vector<16x32xf32>
      %30 = arith.addf %27, %29 : vector<16x32xf32>
      %c0_26 = arith.constant 0 : index
      %c0_27 = arith.constant 0 : index
      %31 = vector.load %arg7[%c0_26, %c0_27] : memref<16x32xf32, #tpu.memory_space<vmem>>, vector<16x32xf32>
      tpu.vector_store %arg7[%c0_26, %c0_27], %30 {strides = array<i32>} : memref<16x32xf32, #tpu.memory_space<vmem>>, vector<16x32xf32>,
    } else {
    }
    return
  }
  func.func @transform_0(%arg0: i32, %arg1: i32) -> (i32, i32) {
    %c0_i32 = arith.constant 0 : i32
    %c0_i32_0 = arith.constant 0 : i32
    return %arg0, %c0_i32 : i32, i32
  }
  func.func @transform_1(%arg0: i32, %arg1: i32) -> (i32, i32) {
    %c0_i32 = arith.constant 0 : i32
    %c0_i32_0 = arith.constant 0 : i32
    return %c0_i32, %arg1 : i32, i32
  }
  func.func @transform_2(%arg0: i32, %arg1: i32) -> (i32, i32) {
    %c0_i32 = arith.constant 0 : i32
    %c0_i32_0 = arith.constant 0 : i32
    return %c0_i32, %arg1 : i32, i32
  }
  func.func @transform_3(%arg0: i32, %arg1: i32) -> (i32, i32) {
    %c0_i32 = arith.constant 0 : i32
    %c0_i32_0 = arith.constant 0 : i32
    return %arg1, %c0_i32 : i32, i32
  }
  func.func @transform_4(%arg0: i32, %arg1: i32) -> (i32, i32) {
    %c0_i32 = arith.constant 0 : i32
    %c0_i32_0 = arith.constant 0 : i32
    %c0_i32_1 = arith.constant 0 : i32
    return %c0_i32, %c0_i32_0 : i32, i32
  }
  func.func @transform_5(%arg0: i32, %arg1: i32) -> (i32, i32) {
    %c0_i32 = arith.constant 0 : i32
    %c0_i32_0 = arith.constant 0 : i32
    return %arg0, %c0_i32 : i32, i32
  }
}

module attributes {stable_mosaic.version = 11 : i64} {
  func.func @_ffn_kernel(%arg0: i32, %arg1: i32, %arg2: memref<16x32xf32, #tpu.memory_space<vmem>>, %arg3: memref<32x64xf32, #tpu.memory_space<vmem>>, %arg4: memref<1x64xf32, #tpu.memory_space<vmem>>, %arg5: memref<64x32xf32, #tpu.memory_space<vmem>>, %arg6: memref<1x32xf32, #tpu.memory_space<vmem>>, %arg7: memref<16x32xf32, #tpu.memory_space<vmem>>, %arg8: memref<16x32xf32, #tpu.memory_space<vmem>>, %arg9: memref<16x64xf32, #tpu.memory_space<vmem>>) attributes {dimension_semantics = [#tpu.dimension_semantics<parallel>, #tpu.dimension_semantics<arbitrary>], iteration_bounds = array<i64: 1, 1>, scalar_prefetch = 0 : i64, scratch_operands = 2 : i64, tpu.core_type = #tpu.core_type<tc>, window_params = [{transform_indices = @transform_0, window_bounds = array<i64: 16, 32>}, {transform_indices = @transform_1, window_bounds = array<i64: 32, 64>}, {transform_indices = @transform_2, window_bounds = array<i64: 1, 64>}, {transform_indices = @transform_3, window_bounds = array<i64: 64, 32>}, {pipeline_mode = #tpu.pipeline_mode<synchronous>, transform_indices = @transform_4, window_bounds = array<i64: 1, 32>}, {transform_indices = @transform_5, window_bounds = array<i64: 16, 32>}]} {
    %c0_i32 = arith.constant 0 : i32
    %0 = arith.cmpi eq, %arg1, %c0_i32 : i32
    %1 = arith.extui %0 : i1 to i32
    %c0_i32_0 = arith.constant 0 : i32
    %2 = arith.cmpi ne, %1, %c0_i32_0 : i32
    scf.if %2 {
      %cst_22 = arith.constant 0.000000e+00 : f32
      %27 = vector.broadcast %cst_22 : f32 to vector<16x32xf32>
      %c0_23 = arith.constant 0 : index
      %c0_24 = arith.constant 0 : index
      %28 = vector.load %arg8[%c0_23, %c0_24] : memref<16x32xf32, #tpu.memory_space<vmem>>, vector<16x32xf32>
      tpu.vector_store %arg8[%c0_23, %c0_24], %27 {strides = array<i32>} : memref<16x32xf32, #tpu.memory_space<vmem>>, vector<16x32xf32>,
    } else {
    }
    %c0 = arith.constant 0 : index
    %c0_1 = arith.constant 0 : index
    %3 = vector.load %arg2[%c0, %c0_1] : memref<16x32xf32, #tpu.memory_space<vmem>>, vector<16x32xf32>
    %c0_2 = arith.constant 0 : index
    %c0_3 = arith.constant 0 : index
    %4 = vector.load %arg3[%c0_2, %c0_3] : memref<32x64xf32, #tpu.memory_space<vmem>>, vector<32x64xf32>
    %cst = arith.constant dense<0.000000e+00> : vector<16x64xf32>
    %5 = tpu.matmul %3, %4, %cst {dimension_numbers = #tpu.dot_dimension_numbers<[1], [0], [0], [1], [0, 0, 1, 1], [], []>} : vector<16x32xf32>, vector<32x64xf32>, vector<16x64xf32> -> vector<16x64xf32>
    %c0_4 = arith.constant 0 : index
    %c0_5 = arith.constant 0 : index
    %6 = vector.load %arg4[%c0_4, %c0_5] : memref<1x64xf32, #tpu.memory_space<vmem>>, vector<1x64xf32>
    %7 = vector.broadcast %6 : vector<1x64xf32> to vector<16x64xf32>
    %8 = arith.addf %5, %7 : vector<16x64xf32>
    %cst_6 = arith.constant 5.000000e-01 : f32
    %9 = vector.broadcast %cst_6 : f32 to vector<16x64xf32>
    %10 = arith.mulf %9, %8 : vector<16x64xf32>
    %cst_7 = arith.constant 0.707106769 : f32
    %11 = vector.broadcast %cst_7 : f32 to vector<16x64xf32>
    %12 = arith.mulf %8, %11 : vector<16x64xf32>
    %13 = math.erf %12 : vector<16x64xf32>
    %cst_8 = arith.constant 1.000000e+00 : f32
    %14 = vector.broadcast %cst_8 : f32 to vector<16x64xf32>
    %15 = arith.addf %14, %13 : vector<16x64xf32>
    %16 = arith.mulf %10, %15 : vector<16x64xf32>
    %c0_9 = arith.constant 0 : index
    %c0_10 = arith.constant 0 : index
    %17 = vector.load %arg9[%c0_9, %c0_10] : memref<16x64xf32, #tpu.memory_space<vmem>>, vector<16x64xf32>
    tpu.vector_store %arg9[%c0_9, %c0_10], %16 {strides = array<i32>} : memref<16x64xf32, #tpu.memory_space<vmem>>, vector<16x64xf32>,
    %c0_11 = arith.constant 0 : index
    %c0_12 = arith.constant 0 : index
    %18 = vector.load %arg8[%c0_11, %c0_12] : memref<16x32xf32, #tpu.memory_space<vmem>>, vector<16x32xf32>
    %c0_13 = arith.constant 0 : index
    %c0_14 = arith.constant 0 : index
    %19 = vector.load %arg9[%c0_13, %c0_14] : memref<16x64xf32, #tpu.memory_space<vmem>>, vector<16x64xf32>
    %c0_15 = arith.constant 0 : index
    %c0_16 = arith.constant 0 : index
    %20 = vector.load %arg5[%c0_15, %c0_16] : memref<64x32xf32, #tpu.memory_space<vmem>>, vector<64x32xf32>
    %cst_17 = arith.constant dense<0.000000e+00> : vector<16x32xf32>
    %21 = tpu.matmul %19, %20, %cst_17 {dimension_numbers = #tpu.dot_dimension_numbers<[1], [0], [0], [1], [0, 0, 1, 1], [], []>} : vector<16x64xf32>, vector<64x32xf32>, vector<16x32xf32> -> vector<16x32xf32>
    %22 = arith.addf %18, %21 : vector<16x32xf32>
    %c0_18 = arith.constant 0 : index
    %c0_19 = arith.constant 0 : index
    %23 = vector.load %arg8[%c0_18, %c0_19] : memref<16x32xf32, #tpu.memory_space<vmem>>, vector<16x32xf32>
    tpu.vector_store %arg8[%c0_18, %c0_19], %22 {strides = array<i32>} : memref<16x32xf32, #tpu.memory_space<vmem>>, vector<16x32xf32>,
    %c0_i32_20 = arith.constant 0 : i32
    %24 = arith.cmpi eq, %arg1, %c0_i32_20 : i32
    %25 = arith.extui %24 : i1 to i32
    %c0_i32_21 = arith.constant 0 : i32
    %26 = arith.cmpi ne, %25, %c0_i32_21 : i32
    scf.if %26 {
      %c0_22 = arith.constant 0 : index
      %c0_23 = arith.constant 0 : index
      %27 = vector.load %arg8[%c0_22, %c0_23] : memref<16x32xf32, #tpu.memory_space<vmem>>, vector<16x32xf32>
      %c0_24 = arith.constant 0 : index
      %c0_25 = arith.constant 0 : index
      %28 = vector.load %arg6[%c0_24, %c0_25] : memref<1x32xf32, #tpu.memory_space<vmem>>, vector<1x32xf32>
      %29 = vector.broadcast %28 : vector<1x32xf32> to vector<16x32xf32>
      %30 = arith.addf %27, %29 : vector<16x32xf32>
      %c0_26 = arith.constant 0 : index
      %c0_27 = arith.constant 0 : index
      %31 = vector.load %arg7[%c0_26, %c0_27] : memref<16x32xf32, #tpu.memory_space<vmem>>, vector<16x32xf32>
      tpu.vector_store %arg7[%c0_26, %c0_27], %30 {strides = array<i32>} : memref<16x32xf32, #tpu.memory_space<vmem>>, vector<16x32xf32>,
    } else {
    }
    return
  }
  func.func @transform_0(%arg0: i32, %arg1: i32) -> (i32, i32) {
    %c0_i32 = arith.constant 0 : i32
    %c0_i32_0 = arith.constant 0 : i32
    return %arg0, %c0_i32 : i32, i32
  }
  func.func @transform_1(%arg0: i32, %arg1: i32) -> (i32, i32) {
    %c0_i32 = arith.constant 0 : i32
    %c0_i32_0 = arith.constant 0 : i32
    return %c0_i32, %arg1 : i32, i32
  }
  func.func @transform_2(%arg0: i32, %arg1: i32) -> (i32, i32) {
    %c0_i32 = arith.constant 0 : i32
    %c0_i32_0 = arith.constant 0 : i32
    return %c0_i32, %arg1 : i32, i32
  }
  func.func @transform_3(%arg0: i32, %arg1: i32) -> (i32, i32) {
    %c0_i32 = arith.constant 0 : i32
    %c0_i32_0 = arith.constant 0 : i32
    return %arg1, %c0_i32 : i32, i32
  }
  func.func @transform_4(%arg0: i32, %arg1: i32) -> (i32, i32) {
    %c0_i32 = arith.constant 0 : i32
    %c0_i32_0 = arith.constant 0 : i32
    %c0_i32_1 = arith.constant 0 : i32
    return %c0_i32, %c0_i32_0 : i32, i32
  }
  func.func @transform_5(%arg0: i32, %arg1: i32) -> (i32, i32) {
    %c0_i32 = arith.constant 0 : i32
    %c0_i32_0 = arith.constant 0 : i32
    return %arg0, %c0_i32 : i32, i32
  }
}

</mosaic_0001>

<llo_original>
// kernel: tpu_custom_call.1
$region0: #{tpu_custom_call.1}
  #allocation0 [shape = 'u32[]', space=smem, size = 0x4, offset = 0x4, fixed_abs, tag = 'smem constant byte address 0x4 - core index']
  #allocation1 [shape = 'u32[144,128]{1,0:T(1,128)}', space=vmem, size = 0x12000, scoped, tag = 'internal scratch']
  #allocation2 [shape = 'f32[16,32]{1,0:T(8,128)}', space=vmem, size = 0x2000, scoped, tag = 'scratch operand']
  #allocation3 [shape = 'f32[16,64]{1,0:T(8,128)}', space=vmem, size = 0x2000, scoped, tag = 'scratch operand']
  %s0 = inlined_call_operand.vmem [shape: f32[16,32], index: 0, kind: input, shape index: {}]
  %s1 = inlined_call_operand.vmem [shape: f32[32,64], index: 1, kind: input, shape index: {}]
  %s2 = inlined_call_operand.vmem [shape: f32[1,64], index: 2, kind: input, shape index: {}]
  %s3 = inlined_call_operand.vmem [shape: f32[64,32], index: 3, kind: input, shape index: {}]
  %s4 = inlined_call_operand.vmem [shape: f32[1,32], index: 4, kind: input, shape index: {}]
  %s5 = inlined_call_operand.hbm [shape: f32[16,32], index: 5, kind: output, shape index: {}]
  %s6 = sld [smem:[#allocation0]]
  $region38: #{tpu_custom_call.1} parent=0
    _
  %s8 = ssub.s32 1, %s6
  %s9 = scalar_select 0, %s8, %s6
  $region1: #{tpu_custom_call.1} parent=0
    #allocation4 [shape = 'u8[8192]{0}', space=vmem, size = 0x2000, scoped, tag = 'output window, operand 0, single buffered']
    #allocation5 [shape = 's32[1]{0}', space=sflag, size = 0x4, scoped, tag = 'scoped memory for tpu_custom_call.1']
    %10 = vsyncpa [#allocation5], 0
    // Predicated region
    $region2: #{tpu_custom_call.1} parent=1 // pred_check
      _
    $region3: #{tpu_custom_call.1} parent=1 // pred_check_branch
      %12 = sbr.rel (0) target = $region5
    $region4: #{tpu_custom_call.1} parent=1 // pred_region
      _
    $region5: #{tpu_custom_call.1} parent=1 // pred_fallthru
      _
    // Predicated region
    $region6: #{tpu_custom_call.1} parent=1 // pred_check
      _
    $region7: #{tpu_custom_call.1} parent=1 // pred_check_branch
      %14 = sbr.rel (0) target = $region9
    $region8: #{tpu_custom_call.1} parent=1 // pred_region
      _
    $region9: #{tpu_custom_call.1} parent=1 // pred_fallthru
      _
    // Predicated region
    $region10: #{tpu_custom_call.1} parent=1 // pred_check
      _
    $region11: #{tpu_custom_call.1} parent=1 // pred_check_branch
      %16 = sbr.rel (0) target = $region13
    $region12: #{tpu_custom_call.1} parent=1 // pred_region
      _
    $region13: #{tpu_custom_call.1} parent=1 // pred_fallthru
      _
    // Predicated region
    $region14: #{tpu_custom_call.1} parent=1 // pred_check
      _
    $region15: #{tpu_custom_call.1} parent=1 // pred_check_branch
      %18 = sbr.rel (0) target = $region17
    $region16: #{tpu_custom_call.1} parent=1 // pred_region
      _
    $region17: #{tpu_custom_call.1} parent=1 // pred_fallthru
      _
    // Predicated region
    $region18: #{tpu_custom_call.1} parent=1 // pred_check
      _
    $region19: #{tpu_custom_call.1} parent=1 // pred_check_branch
      %20 = sbr.rel (0) target = $region21
    $region20: #{tpu_custom_call.1} parent=1 // pred_region
      _
    $region21: #{tpu_custom_call.1} parent=1 // pred_fallthru
      _
    %p21 = scmp.eq.s32.totalorder 0, 0
    // Predicated region
    $region22: #{tpu_custom_call.1} parent=1 // pred_check
      %p22 = pneg %p21
    $region23: #{tpu_custom_call.1} parent=1 // pred_check_branch
      %24 = sbr.rel (%p22) target = $region25
    $region24: #{tpu_custom_call.1} parent=1 // pred_region
      %vm25 = vcmask 261120
      %26 = vst.msk [vmem:[#allocation2] sm:$0xff] %vm25, 0.0
      %27 = vst.msk [vmem:[#allocation2 + $0x8] sm:$0xff] %vm25, 0.0
    $region25: #{tpu_custom_call.1} parent=1 // pred_fallthru
      _
    %v28 = vld [vmem:[%s0] sm:$0xff]
    %v29 = vld [vmem:[%s0 + $0x8] sm:$0xff]
    %v30 = vld [vmem:[%s1] sm:$0xff]
    %v31 = vld [vmem:[%s1 + $0x8] sm:$0xff]
    %v32 = vld [vmem:[%s1 + $0x10] sm:$0xff]
    %v33 = vld [vmem:[%s1 + $0x18] sm:$0xff]
    %v34 = vld [vmem:[%s2] sm:$0x1]
    %v36 = vlaneseq
    %v37 = vshrl.u32 %v36, 7
    %v38 = vsub.s32 0, %v37
    %v39 = vrot.slane %v34, %v38
    %vm41 = vcmask 261120
    %v43 = vsel %vm41, %v28, 0
    %v46 = vsel %vm41, %v29, 0
    %48 = vmatprep.subr.mxu0 0.0
    %49 = vmatpush1.msra.mxu0 0.0
    %50 = vmatprep.subr.mxu0 0.0
    %51 = vmatpush1.msra.mxu0 0.0
    %52 = vmatprep.subr.mxu0 0.0
    %53 = vmatpush1.msra.mxu0 0.0
    %54 = vmatprep.subr.mxu0 0.0
    %55 = vmatpush1.msra.mxu0 0.0
    %56 = vmatprep.subr.mxu0 0.0
    %57 = vmatpush1.msra.mxu0 0.0
    %58 = vmatprep.subr.mxu0 0.0
    %59 = vmatpush1.msra.mxu0 0.0
    %60 = vmatprep.subr.mxu0 0.0
    %61 = vmatpush1.msra.mxu0 0.0
    %62 = vmatprep.subr.mxu0 0.0
    %63 = vmatpush1.msra.mxu0 0.0
    %64 = vmatprep.subr.mxu0 0.0
    %65 = vmatpush1.msra.mxu0 0.0
    %66 = vmatprep.subr.mxu0 0.0
    %67 = vmatpush1.msra.mxu0 0.0
    %68 = vmatprep.subr.mxu0 0.0
    %69 = vmatpush1.msra.mxu0 0.0
    %70 = vmatprep.subr.mxu0 0.0
    %71 = vmatpush1.msra.mxu0 0.0
    %72 = vmatprep.subr.mxu0 0.0
    %73 = vmatpush1.msra.mxu0 %v33
    %74 = vmatprep.subr.mxu0 0.0
    %75 = vmatpush1.msra.mxu0 %v32
    %76 = vmatprep.subr.mxu0 0.0
    %77 = vmatpush1.msra.mxu0 %v31
    %78 = vmatprep.subr.mxu0 0.0
    %79 = vmatpush1.msra.mxu0 %v30
    %80 = vmatprep.subr.mxu0 0.0
    %81 = vmatpush2.msra.mxu0 0.0
    %82 = vmatprep.subr.mxu0 0.0
    %83 = vmatpush2.msra.mxu0 0.0
    %84 = vmatprep.subr.mxu0 0.0
    %85 = vmatpush2.msra.mxu0 0.0
    %86 = vmatprep.subr.mxu0 0.0
    %87 = vmatpush2.msra.mxu0 0.0
    %88 = vmatprep.subr.mxu0 0.0
    %89 = vmatpush2.msra.mxu0 0.0
    %90 = vmatprep.subr.mxu0 0.0
    %91 = vmatpush2.msra.mxu0 0.0
    %92 = vmatprep.subr.mxu0 0.0
    %93 = vmatpush2.msra.mxu0 0.0
    %94 = vmatprep.subr.mxu0 0.0
    %95 = vmatpush2.msra.mxu0 0.0
    %96 = vmatprep.subr.mxu0 0.0
    %97 = vmatpush2.msra.mxu0 0.0
    %98 = vmatprep.subr.mxu0 0.0
    %99 = vmatpush2.msra.mxu0 0.0
    %100 = vmatprep.subr.mxu0 0.0
    %101 = vmatpush2.msra.mxu0 0.0
    %102 = vmatprep.subr.mxu0 0.0
    %103 = vmatpush2.msra.mxu0 0.0
    %104 = vmatprep.subr.mxu0 0.0
    %105 = vmatpush2.msra.mxu0 0.0
    %106 = vmatprep.subr.mxu0 0.0
    %107 = vmatpush2.msra.mxu0 0.0
    %108 = vmatprep.subr.mxu0 0.0
    %109 = vmatpush2.msra.mxu0 0.0
    %110 = vmatprep.subr.mxu0 0.0
    %111 = vmatpush2.msra.mxu0 0.0
    %112 = vmatprep.mubr.f32.mxu0 0.0
    %113 = vmatmul.mubr.f32.gmra.mxu0 %v43
    %v114 = vpop.f32.mrf.mxu0
    %v115 = vadd.f32 %v39, %v114
    %v116 = vpop.f32.mrf.mxu0
    %117 = vmatprep.mubr.f32.mxu0 0.0
    %118 = vmatmul.mubr.f32.gmra.mxu0 %v46
    %v119 = vpop.f32.mrf.mxu0
    %v120 = vadd.f32 %v39, %v119
    %v121 = vpop.f32.mrf.mxu0
    %122 = vdwg.mxu0
    %v123 = vmul.f32 %v115, 0.5
    %v124 = vmul.f32 %v120, 0.5
    %v125 = vmul.f32 %v115, 0.70710677
    %v126 = vmul.f32 %v120, 0.70710677
    %v127 = verf.f32.pop %v125
    %v128 = verf.f32.pop %v126
    %v129 = vadd.f32 %v127, 1.0
    %v130 = vadd.f32 %v128, 1.0
    %v131 = vmul.f32 %v123, %v129
    %v132 = vmul.f32 %v124, %v130
    %vm133 = vcmask 523264
    %134 = vst.msk [vmem:[#allocation3] sm:$0xff] %vm133, %v131
    %135 = vst.msk [vmem:[#allocation3 + $0x8] sm:$0xff] %vm133, %v132
    %v136 = vld [vmem:[#allocation2] sm:$0xff]
    %v137 = vld [vmem:[#allocation2 + $0x8] sm:$0xff]
    %v138 = vld [vmem:[#allocation3] sm:$0xff]
    %v139 = vld [vmem:[#allocation3 + $0x8] sm:$0xff]
    %v140 = vld [vmem:[%s3] sm:$0xff]
    %v141 = vld [vmem:[%s3 + $0x8] sm:$0xff]
    %v142 = vld [vmem:[%s3 + $0x10] sm:$0xff]
    %v143 = vld [vmem:[%s3 + $0x18] sm:$0xff]
    %v144 = vld [vmem:[%s3 + $0x20] sm:$0xff]
    %v145 = vld [vmem:[%s3 + $0x28] sm:$0xff]
    %v146 = vld [vmem:[%s3 + $0x30] sm:$0xff]
    %v147 = vld [vmem:[%s3 + $0x38] sm:$0xff]
    %v149 = vsel %vm133, %v138, 0
    %v152 = vsel %vm133, %v139, 0
    %154 = vmatprep.subr.mxu0 0.0
    %155 = vmatpush1.msra.mxu0 0.0
    %156 = vmatprep.subr.mxu0 0.0
    %157 = vmatpush1.msra.mxu0 0.0
    %158 = vmatprep.subr.mxu0 0.0
    %159 = vmatpush1.msra.mxu0 0.0
    %160 = vmatprep.subr.mxu0 0.0
    %161 = vmatpush1.msra.mxu0 0.0
    %162 = vmatprep.subr.mxu0 0.0
    %163 = vmatpush1.msra.mxu0 0.0
    %164 = vmatprep.subr.mxu0 0.0
    %165 = vmatpush1.msra.mxu0 0.0
    %166 = vmatprep.subr.mxu0 0.0
    %167 = vmatpush1.msra.mxu0 0.0
    %168 = vmatprep.subr.mxu0 0.0
    %169 = vmatpush1.msra.mxu0 0.0
    %170 = vmatprep.subr.mxu0 0.0
    %171 = vmatpush1.msra.mxu0 %v147
    %172 = vmatprep.subr.mxu0 0.0
    %173 = vmatpush1.msra.mxu0 %v146
    %174 = vmatprep.subr.mxu0 0.0
    %175 = vmatpush1.msra.mxu0 %v145
    %176 = vmatprep.subr.mxu0 0.0
    %177 = vmatpush1.msra.mxu0 %v144
    %178 = vmatprep.subr.mxu0 0.0
    %179 = vmatpush1.msra.mxu0 %v143
    %180 = vmatprep.subr.mxu0 0.0
    %181 = vmatpush1.msra.mxu0 %v142
    %182 = vmatprep.subr.mxu0 0.0
    %183 = vmatpush1.msra.mxu0 %v141
    %184 = vmatprep.subr.mxu0 0.0
    %185 = vmatpush1.msra.mxu0 %v140
    %186 = vmatprep.subr.mxu0 0.0
    %187 = vmatpush2.msra.mxu0 0.0
    %188 = vmatprep.subr.mxu0 0.0
    %189 = vmatpush2.msra.mxu0 0.0
    %190 = vmatprep.subr.mxu0 0.0
    %191 = vmatpush2.msra.mxu0 0.0
    %192 = vmatprep.subr.mxu0 0.0
    %193 = vmatpush2.msra.mxu0 0.0
    %194 = vmatprep.subr.mxu0 0.0
    %195 = vmatpush2.msra.mxu0 0.0
    %196 = vmatprep.subr.mxu0 0.0
    %197 = vmatpush2.msra.mxu0 0.0
    %198 = vmatprep.subr.mxu0 0.0
    %199 = vmatpush2.msra.mxu0 0.0
    %200 = vmatprep.subr.mxu0 0.0
    %201 = vmatpush2.msra.mxu0 0.0
    %202 = vmatprep.subr.mxu0 0.0
    %203 = vmatpush2.msra.mxu0 0.0
    %204 = vmatprep.subr.mxu0 0.0
    %205 = vmatpush2.msra.mxu0 0.0
    %206 = vmatprep.subr.mxu0 0.0
    %207 = vmatpush2.msra.mxu0 0.0
    %208 = vmatprep.subr.mxu0 0.0
    %209 = vmatpush2.msra.mxu0 0.0
    %210 = vmatprep.subr.mxu0 0.0
    %211 = vmatpush2.msra.mxu0 0.0
    %212 = vmatprep.subr.mxu0 0.0
    %213 = vmatpush2.msra.mxu0 0.0
    %214 = vmatprep.subr.mxu0 0.0
    %215 = vmatpush2.msra.mxu0 0.0
    %216 = vmatprep.subr.mxu0 0.0
    %217 = vmatpush2.msra.mxu0 0.0
    %218 = vmatprep.mubr.f32.mxu0 0.0
    %219 = vmatmul.mubr.f32.gmra.mxu0 %v149
    %v220 = vpop.f32.mrf.mxu0
    %v221 = vadd.f32 0.0, %v220
    %v222 = vpop.f32.mrf.mxu0
    %223 = vmatprep.mubr.f32.mxu0 0.0
    %224 = vmatmul.mubr.f32.gmra.mxu0 %v152
    %v225 = vpop.f32.mrf.mxu0
    %v226 = vadd.f32 0.0, %v225
    %v227 = vpop.f32.mrf.mxu0
    %228 = vdwg.mxu0
    %v229 = vadd.f32 %v136, %v221
    %v230 = vadd.f32 %v137, %v226
    %231 = vst.msk [vmem:[#allocation2] sm:$0xff] %vm41, %v229
    %232 = vst.msk [vmem:[#allocation2 + $0x8] sm:$0xff] %vm41, %v230
    // Predicated region
    $region26: #{tpu_custom_call.1} parent=1 // pred_check
      %p233 = pneg %p21
    $region27: #{tpu_custom_call.1} parent=1 // pred_check_branch
      %235 = sbr.rel (%p233) target = $region29
    $region28: #{tpu_custom_call.1} parent=1 // pred_region
      %v236 = vld [vmem:[#allocation2] sm:$0xff]
      %v237 = vld [vmem:[#allocation2 + $0x8] sm:$0xff]
      %v238 = vld [vmem:[%s4] sm:$0x1]
      %v240 = vlaneseq
      %v241 = vshrl.u32 %v240, 7
      %v242 = vsub.s32 0, %v241
      %v243 = vrot.slane %v238, %v242
      %v245 = vadd.f32 %v236, %v243
      %v246 = vadd.f32 %v237, %v243
      %247 = vst.msk [vmem:[#allocation4] sm:$0xff] %vm41, %v245
      %248 = vst.msk [vmem:[#allocation4 + $0x8] sm:$0xff] %vm41, %v246
    $region29: #{tpu_custom_call.1} parent=1 // pred_fallthru
      _
    // Predicated region
    $region30: #{tpu_custom_call.1} parent=1 // pred_check
      _
    $region31: #{tpu_custom_call.1} parent=1 // pred_check_branch
      %250 = sbr.rel (0) target = $region33
    $region32: #{tpu_custom_call.1} parent=1 // pred_region
      %s252 = ssub.s32 256, 256
      %253 = vsyncadd [#allocation5], %s252
      %s254 = sshll.u32 [#allocation4], 4
      %s255 = int_to_ptr.vmem [resolvable:$true] %s254
      %260 = dma.vmem_to_hbm [thread:$0]  %s255, 256, %s5, [#allocation5], 128, 128, 8
    $region33: #{tpu_custom_call.1} parent=1 // pred_fallthru
      _
    // Predicated region
    $region34: #{tpu_custom_call.1} parent=1 // pred_check
      _
    $region35: #{tpu_custom_call.1} parent=1 // pred_check_branch
      %262 = sbr.rel (0) target = $region37
    $region36: #{tpu_custom_call.1} parent=1 // pred_region
      %263 = dma.done [#allocation5], 256
    $region37: #{tpu_custom_call.1} parent=1 // pred_fallthru
      _
    %264 = vsyncpa [#allocation5], 1

// kernel: tpu_custom_call.1
$region0: #{tpu_custom_call.1}
  #allocation0 [shape = 'u32[]', space=smem, size = 0x4, offset = 0x4, fixed_abs, tag = 'smem constant byte address 0x4 - core index']
  #allocation1 [shape = 'u32[144,128]{1,0:T(1,128)}', space=vmem, size = 0x12000, scoped, tag = 'internal scratch']
  #allocation2 [shape = 'f32[16,32]{1,0:T(8,128)}', space=vmem, size = 0x2000, scoped, tag = 'scratch operand']
  #allocation3 [shape = 'f32[16,64]{1,0:T(8,128)}', space=vmem, size = 0x2000, scoped, tag = 'scratch operand']
  %s0 = inlined_call_operand.vmem [shape: f32[16,32], index: 0, kind: input, shape index: {}]
  %s1 = inlined_call_operand.vmem [shape: f32[32,64], index: 1, kind: input, shape index: {}]
  %s2 = inlined_call_operand.vmem [shape: f32[1,64], index: 2, kind: input, shape index: {}]
  %s3 = inlined_call_operand.vmem [shape: f32[64,32], index: 3, kind: input, shape index: {}]
  %s4 = inlined_call_operand.vmem [shape: f32[1,32], index: 4, kind: input, shape index: {}]
  %s5 = inlined_call_operand.hbm [shape: f32[16,32], index: 5, kind: output, shape index: {}]
  %s6 = sld [smem:[#allocation0]]
  $region38: #{tpu_custom_call.1} parent=0
    _
  %s8 = ssub.s32 1, %s6
  %s9 = scalar_select 0, %s8, %s6
  $region1: #{tpu_custom_call.1} parent=0
    #allocation4 [shape = 'u8[8192]{0}', space=vmem, size = 0x2000, scoped, tag = 'output window, operand 0, single buffered']
    #allocation5 [shape = 's32[1]{0}', space=sflag, size = 0x4, scoped, tag = 'scoped memory for tpu_custom_call.1']
    %10 = vsyncpa [#allocation5], 0
    // Predicated region
    $region2: #{tpu_custom_call.1} parent=1 // pred_check
      _
    $region3: #{tpu_custom_call.1} parent=1 // pred_check_branch
      %12 = sbr.rel (0) target = $region5
    $region4: #{tpu_custom_call.1} parent=1 // pred_region
      _
    $region5: #{tpu_custom_call.1} parent=1 // pred_fallthru
      _
    // Predicated region
    $region6: #{tpu_custom_call.1} parent=1 // pred_check
      _
    $region7: #{tpu_custom_call.1} parent=1 // pred_check_branch
      %14 = sbr.rel (0) target = $region9
    $region8: #{tpu_custom_call.1} parent=1 // pred_region
      _
    $region9: #{tpu_custom_call.1} parent=1 // pred_fallthru
      _
    // Predicated region
    $region10: #{tpu_custom_call.1} parent=1 // pred_check
      _
    $region11: #{tpu_custom_call.1} parent=1 // pred_check_branch
      %16 = sbr.rel (0) target = $region13
    $region12: #{tpu_custom_call.1} parent=1 // pred_region
      _
    $region13: #{tpu_custom_call.1} parent=1 // pred_fallthru
      _
    // Predicated region
    $region14: #{tpu_custom_call.1} parent=1 // pred_check
      _
    $region15: #{tpu_custom_call.1} parent=1 // pred_check_branch
      %18 = sbr.rel (0) target = $region17
    $region16: #{tpu_custom_call.1} parent=1 // pred_region
      _
    $region17: #{tpu_custom_call.1} parent=1 // pred_fallthru
      _
    // Predicated region
    $region18: #{tpu_custom_call.1} parent=1 // pred_check
      _
    $region19: #{tpu_custom_call.1} parent=1 // pred_check_branch
      %20 = sbr.rel (0) target = $region21
    $region20: #{tpu_custom_call.1} parent=1 // pred_region
      _
    $region21: #{tpu_custom_call.1} parent=1 // pred_fallthru
      _
    %p21 = scmp.eq.s32.totalorder 0, 0
    // Predicated region
    $region22: #{tpu_custom_call.1} parent=1 // pred_check
      %p22 = pneg %p21
    $region23: #{tpu_custom_call.1} parent=1 // pred_check_branch
      %24 = sbr.rel (%p22) target = $region25
    $region24: #{tpu_custom_call.1} parent=1 // pred_region
      %vm25 = vcmask 261120
      %26 = vst.msk [vmem:[#allocation2] sm:$0xff] %vm25, 0.0
      %27 = vst.msk [vmem:[#allocation2 + $0x8] sm:$0xff] %vm25, 0.0
    $region25: #{tpu_custom_call.1} parent=1 // pred_fallthru
      _
    %v28 = vld [vmem:[%s0] sm:$0xff]
    %v29 = vld [vmem:[%s0 + $0x8] sm:$0xff]
    %v30 = vld [vmem:[%s1] sm:$0xff]
    %v31 = vld [vmem:[%s1 + $0x8] sm:$0xff]
    %v32 = vld [vmem:[%s1 + $0x10] sm:$0xff]
    %v33 = vld [vmem:[%s1 + $0x18] sm:$0xff]
    %v34 = vld [vmem:[%s2] sm:$0x1]
    %v36 = vlaneseq
    %v37 = vshrl.u32 %v36, 7
    %v38 = vsub.s32 0, %v37
    %v39 = vrot.slane %v34, %v38
    %vm41 = vcmask 261120
    %v43 = vsel %vm41, %v28, 0
    %v46 = vsel %vm41, %v29, 0
    %48 = vmatprep.subr.mxu0 0.0
    %49 = vmatpush1.msra.mxu0 0.0
    %50 = vmatprep.subr.mxu0 0.0
    %51 = vmatpush1.msra.mxu0 0.0
    %52 = vmatprep.subr.mxu0 0.0
    %53 = vmatpush1.msra.mxu0 0.0
    %54 = vmatprep.subr.mxu0 0.0
    %55 = vmatpush1.msra.mxu0 0.0
    %56 = vmatprep.subr.mxu0 0.0
    %57 = vmatpush1.msra.mxu0 0.0
    %58 = vmatprep.subr.mxu0 0.0
    %59 = vmatpush1.msra.mxu0 0.0
    %60 = vmatprep.subr.mxu0 0.0
    %61 = vmatpush1.msra.mxu0 0.0
    %62 = vmatprep.subr.mxu0 0.0
    %63 = vmatpush1.msra.mxu0 0.0
    %64 = vmatprep.subr.mxu0 0.0
    %65 = vmatpush1.msra.mxu0 0.0
    %66 = vmatprep.subr.mxu0 0.0
    %67 = vmatpush1.msra.mxu0 0.0
    %68 = vmatprep.subr.mxu0 0.0
    %69 = vmatpush1.msra.mxu0 0.0
    %70 = vmatprep.subr.mxu0 0.0
    %71 = vmatpush1.msra.mxu0 0.0
    %72 = vmatprep.subr.mxu0 0.0
    %73 = vmatpush1.msra.mxu0 %v33
    %74 = vmatprep.subr.mxu0 0.0
    %75 = vmatpush1.msra.mxu0 %v32
    %76 = vmatprep.subr.mxu0 0.0
    %77 = vmatpush1.msra.mxu0 %v31
    %78 = vmatprep.subr.mxu0 0.0
    %79 = vmatpush1.msra.mxu0 %v30
    %80 = vmatprep.subr.mxu0 0.0
    %81 = vmatpush2.msra.mxu0 0.0
    %82 = vmatprep.subr.mxu0 0.0
    %83 = vmatpush2.msra.mxu0 0.0
    %84 = vmatprep.subr.mxu0 0.0
    %85 = vmatpush2.msra.mxu0 0.0
    %86 = vmatprep.subr.mxu0 0.0
    %87 = vmatpush2.msra.mxu0 0.0
    %88 = vmatprep.subr.mxu0 0.0
    %89 = vmatpush2.msra.mxu0 0.0
    %90 = vmatprep.subr.mxu0 0.0
    %91 = vmatpush2.msra.mxu0 0.0
    %92 = vmatprep.subr.mxu0 0.0
    %93 = vmatpush2.msra.mxu0 0.0
    %94 = vmatprep.subr.mxu0 0.0
    %95 = vmatpush2.msra.mxu0 0.0
    %96 = vmatprep.subr.mxu0 0.0
    %97 = vmatpush2.msra.mxu0 0.0
    %98 = vmatprep.subr.mxu0 0.0
    %99 = vmatpush2.msra.mxu0 0.0
    %100 = vmatprep.subr.mxu0 0.0
    %101 = vmatpush2.msra.mxu0 0.0
    %102 = vmatprep.subr.mxu0 0.0
    %103 = vmatpush2.msra.mxu0 0.0
    %104 = vmatprep.subr.mxu0 0.0
    %105 = vmatpush2.msra.mxu0 0.0
    %106 = vmatprep.subr.mxu0 0.0
    %107 = vmatpush2.msra.mxu0 0.0
    %108 = vmatprep.subr.mxu0 0.0
    %109 = vmatpush2.msra.mxu0 0.0
    %110 = vmatprep.subr.mxu0 0.0
    %111 = vmatpush2.msra.mxu0 0.0
    %112 = vmatprep.mubr.f32.mxu0 0.0
    %113 = vmatmul.mubr.f32.gmra.mxu0 %v43
    %v114 = vpop.f32.mrf.mxu0
    %v115 = vadd.f32 %v39, %v114
    %v116 = vpop.f32.mrf.mxu0
    %117 = vmatprep.mubr.f32.mxu0 0.0
    %118 = vmatmul.mubr.f32.gmra.mxu0 %v46
    %v119 = vpop.f32.mrf.mxu0
    %v120 = vadd.f32 %v39, %v119
    %v121 = vpop.f32.mrf.mxu0
    %122 = vdwg.mxu0
    %v123 = vmul.f32 %v115, 0.5
    %v124 = vmul.f32 %v120, 0.5
    %v125 = vmul.f32 %v115, 0.70710677
    %v126 = vmul.f32 %v120, 0.70710677
    %v127 = verf.f32.pop %v125
    %v128 = verf.f32.pop %v126
    %v129 = vadd.f32 %v127, 1.0
    %v130 = vadd.f32 %v128, 1.0
    %v131 = vmul.f32 %v123, %v129
    %v132 = vmul.f32 %v124, %v130
    %vm133 = vcmask 523264
    %134 = vst.msk [vmem:[#allocation3] sm:$0xff] %vm133, %v131
    %135 = vst.msk [vmem:[#allocation3 + $0x8] sm:$0xff] %vm133, %v132
    %v136 = vld [vmem:[#allocation2] sm:$0xff]
    %v137 = vld [vmem:[#allocation2 + $0x8] sm:$0xff]
    %v138 = vld [vmem:[#allocation3] sm:$0xff]
    %v139 = vld [vmem:[#allocation3 + $0x8] sm:$0xff]
    %v140 = vld [vmem:[%s3] sm:$0xff]
    %v141 = vld [vmem:[%s3 + $0x8] sm:$0xff]
    %v142 = vld [vmem:[%s3 + $0x10] sm:$0xff]
    %v143 = vld [vmem:[%s3 + $0x18] sm:$0xff]
    %v144 = vld [vmem:[%s3 + $0x20] sm:$0xff]
    %v145 = vld [vmem:[%s3 + $0x28] sm:$0xff]
    %v146 = vld [vmem:[%s3 + $0x30] sm:$0xff]
    %v147 = vld [vmem:[%s3 + $0x38] sm:$0xff]
    %v149 = vsel %vm133, %v138, 0
    %v152 = vsel %vm133, %v139, 0
    %154 = vmatprep.subr.mxu0 0.0
    %155 = vmatpush1.msra.mxu0 0.0
    %156 = vmatprep.subr.mxu0 0.0
    %157 = vmatpush1.msra.mxu0 0.0
    %158 = vmatprep.subr.mxu0 0.0
    %159 = vmatpush1.msra.mxu0 0.0
    %160 = vmatprep.subr.mxu0 0.0
    %161 = vmatpush1.msra.mxu0 0.0
    %162 = vmatprep.subr.mxu0 0.0
    %163 = vmatpush1.msra.mxu0 0.0
    %164 = vmatprep.subr.mxu0 0.0
    %165 = vmatpush1.msra.mxu0 0.0
    %166 = vmatprep.subr.mxu0 0.0
    %167 = vmatpush1.msra.mxu0 0.0
    %168 = vmatprep.subr.mxu0 0.0
    %169 = vmatpush1.msra.mxu0 0.0
    %170 = vmatprep.subr.mxu0 0.0
    %171 = vmatpush1.msra.mxu0 %v147
    %172 = vmatprep.subr.mxu0 0.0
    %173 = vmatpush1.msra.mxu0 %v146
    %174 = vmatprep.subr.mxu0 0.0
    %175 = vmatpush1.msra.mxu0 %v145
    %176 = vmatprep.subr.mxu0 0.0
    %177 = vmatpush1.msra.mxu0 %v144
    %178 = vmatprep.subr.mxu0 0.0
    %179 = vmatpush1.msra.mxu0 %v143
    %180 = vmatprep.subr.mxu0 0.0
    %181 = vmatpush1.msra.mxu0 %v142
    %182 = vmatprep.subr.mxu0 0.0
    %183 = vmatpush1.msra.mxu0 %v141
    %184 = vmatprep.subr.mxu0 0.0
    %185 = vmatpush1.msra.mxu0 %v140
    %186 = vmatprep.subr.mxu0 0.0
    %187 = vmatpush2.msra.mxu0 0.0
    %188 = vmatprep.subr.mxu0 0.0
    %189 = vmatpush2.msra.mxu0 0.0
    %190 = vmatprep.subr.mxu0 0.0
    %191 = vmatpush2.msra.mxu0 0.0
    %192 = vmatprep.subr.mxu0 0.0
    %193 = vmatpush2.msra.mxu0 0.0
    %194 = vmatprep.subr.mxu0 0.0
    %195 = vmatpush2.msra.mxu0 0.0
    %196 = vmatprep.subr.mxu0 0.0
    %197 = vmatpush2.msra.mxu0 0.0
    %198 = vmatprep.subr.mxu0 0.0
    %199 = vmatpush2.msra.mxu0 0.0
    %200 = vmatprep.subr.mxu0 0.0
    %201 = vmatpush2.msra.mxu0 0.0
    %202 = vmatprep.subr.mxu0 0.0
    %203 = vmatpush2.msra.mxu0 0.0
    %204 = vmatprep.subr.mxu0 0.0
    %205 = vmatpush2.msra.mxu0 0.0
    %206 = vmatprep.subr.mxu0 0.0
    %207 = vmatpush2.msra.mxu0 0.0
    %208 = vmatprep.subr.mxu0 0.0
    %209 = vmatpush2.msra.mxu0 0.0
    %210 = vmatprep.subr.mxu0 0.0
    %211 = vmatpush2.msra.mxu0 0.0
    %212 = vmatprep.subr.mxu0 0.0
    %213 = vmatpush2.msra.mxu0 0.0
    %214 = vmatprep.subr.mxu0 0.0
    %215 = vmatpush2.msra.mxu0 0.0
    %216 = vmatprep.subr.mxu0 0.0
    %217 = vmatpush2.msra.mxu0 0.0
    %218 = vmatprep.mubr.f32.mxu0 0.0
    %219 = vmatmul.mubr.f32.gmra.mxu0 %v149
    %v220 = vpop.f32.mrf.mxu0
    %v221 = vadd.f32 0.0, %v220
    %v222 = vpop.f32.mrf.mxu0
    %223 = vmatprep.mubr.f32.mxu0 0.0
    %224 = vmatmul.mubr.f32.gmra.mxu0 %v152
    %v225 = vpop.f32.mrf.mxu0
    %v226 = vadd.f32 0.0, %v225
    %v227 = vpop.f32.mrf.mxu0
    %228 = vdwg.mxu0
    %v229 = vadd.f32 %v136, %v221
    %v230 = vadd.f32 %v137, %v226
    %231 = vst.msk [vmem:[#allocation2] sm:$0xff] %vm41, %v229
    %232 = vst.msk [vmem:[#allocation2 + $0x8] sm:$0xff] %vm41, %v230
    // Predicated region
    $region26: #{tpu_custom_call.1} parent=1 // pred_check
      %p233 = pneg %p21
    $region27: #{tpu_custom_call.1} parent=1 // pred_check_branch
      %235 = sbr.rel (%p233) target = $region29
    $region28: #{tpu_custom_call.1} parent=1 // pred_region
      %v236 = vld [vmem:[#allocation2] sm:$0xff]
      %v237 = vld [vmem:[#allocation2 + $0x8] sm:$0xff]
      %v238 = vld [vmem:[%s4] sm:$0x1]
      %v240 = vlaneseq
      %v241 = vshrl.u32 %v240, 7
      %v242 = vsub.s32 0, %v241
      %v243 = vrot.slane %v238, %v242
      %v245 = vadd.f32 %v236, %v243
      %v246 = vadd.f32 %v237, %v243
      %247 = vst.msk [vmem:[#allocation4] sm:$0xff] %vm41, %v245
      %248 = vst.msk [vmem:[#allocation4 + $0x8] sm:$0xff] %vm41, %v246
    $region29: #{tpu_custom_call.1} parent=1 // pred_fallthru
      _
    // Predicated region
    $region30: #{tpu_custom_call.1} parent=1 // pred_check
      _
    $region31: #{tpu_custom_call.1} parent=1 // pred_check_branch
      %250 = sbr.rel (0) target = $region33
    $region32: #{tpu_custom_call.1} parent=1 // pred_region
      %s252 = ssub.s32 256, 256
      %253 = vsyncadd [#allocation5], %s252
      %s254 = sshll.u32 [#allocation4], 4
      %s255 = int_to_ptr.vmem [resolvable:$true] %s254
      %260 = dma.vmem_to_hbm [thread:$0]  %s255, 256, %s5, [#allocation5], 128, 128, 8
    $region33: #{tpu_custom_call.1} parent=1 // pred_fallthru
      _
    // Predicated region
    $region34: #{tpu_custom_call.1} parent=1 // pred_check
      _
    $region35: #{tpu_custom_call.1} parent=1 // pred_check_branch
      %262 = sbr.rel (0) target = $region37
    $region36: #{tpu_custom_call.1} parent=1 // pred_region
      %263 = dma.done [#allocation5], 256
    $region37: #{tpu_custom_call.1} parent=1 // pred_fallthru
      _
    %264 = vsyncpa [#allocation5], 1

</llo_original>
